<compile_context>
chip_gen: v7x
topology: tpu7x:2x2x1
jax: 0.10.0
libtpu: 0.0.40
codegen_flags: <defaults>
</compile_context>

<pallas_src>
import jax
import jax.numpy as jnp
from jax.experimental import pallas as pl
from jax.experimental.pallas import tpu as pltpu

HIDDEN = 128
MAX_TILE_B = 2048   # rows per grid step cap (per-tile VMEM stays ~< 4 MiB even at the cap)
SPLIT_B = 512       # below this, a single grid step wins on every generation (v5e/v6e/v7x)


def _round_up(a, m):
    return -(-a // m) * m


def dqn_kernel(x_ref, w1_ref, b1_ref, w2_ref, b2_ref, w3_ref, b3_ref, o_ref):
    """Fused fc1+ReLU -> fc2+ReLU -> fc3 on one (tile_b, state_size) batch tile.

    bf16 MXU operands (one MXU pass per matmul); accumulation, bias add and ReLU in f32.
    The final store is a narrow (tile_b, action_size) masked store -- cheap at this scale
    and it removes the 64x-amplified padded f32 writeback of the previous version.
    """
    x = x_ref[...].astype(jnp.bfloat16)                                      # (TB, K)
    h1 = jnp.dot(x, w1_ref[...], preferred_element_type=jnp.float32) + b1_ref[...]
    h1 = jnp.maximum(h1, 0.0).astype(jnp.bfloat16)                           # (TB, 128)
    h2 = jnp.dot(h1, w2_ref[...], preferred_element_type=jnp.float32) + b2_ref[...]
    h2 = jnp.maximum(h2, 0.0).astype(jnp.bfloat16)                           # (TB, 128)
    q = jnp.dot(h2, w3_ref[...], preferred_element_type=jnp.float32) + b3_ref[...]
    o_ref[...] = q.astype(o_ref.dtype)                                       # (TB, A)


def pack_params(params):
    """One-time packing (hoisted out of the per-call path): bf16 matmul weights,
    (1, N) f32 biases.  Keep the f32 master copy in `params` for any training path."""
    def as_bias(b):
        return jnp.asarray(b, jnp.float32).reshape(1, -1)
    return {
        "w1": jnp.asarray(params["w1"], jnp.bfloat16),
        "b1": as_bias(params["b1"]),
        "w2": jnp.asarray(params["w2"], jnp.bfloat16),
        "b2": as_bias(params["b2"]),
        "w3": jnp.asarray(params["w3"], jnp.bfloat16),
        "b3": as_bias(params["b3"]),
    }


def _choose_tiling(batch):
    """Pick (tile_b, n_tiles): 1 grid step for small batches, >=2 even steps for big ones."""
    b8 = _round_up(batch, 8)          # sublane granularity only -- no 128-row padding for tiny B
    if b8 < SPLIT_B:
        n_tiles = 1                    # single grid step: minimal fixed per-step overhead
    else:
        # >=2 even grid steps so the "parallel" batch axis puts one tile per v7x TensorCore,
        # without shrinking tiles below the overhead-amortization sweet spot.
        n_tiles = max(2, _round_up(-(-b8 // MAX_TILE_B), 2))
    tile_b = _round_up(-(-b8 // n_tiles), 8)
    return tile_b, n_tiles


@jax.jit
def dqn_forward(x, packed):
    """x: (B, state_size) f32; packed: output of pack_params.

    Returns (B, action_size) f32 Q-values (same semantics as the PyTorch forward).
    """
    B, K = x.shape
    action_size = packed["w3"].shape[1]

    tile_b, n_tiles = _choose_tiling(B)
    b_pad = tile_b * n_tiles
    if b_pad != B:
        x = jnp.pad(x, ((0, b_pad - B), (0, 0)))

    # Constant block index across the grid => fetched once, VMEM-resident across steps.
    def const(a):
        return pl.BlockSpec(a.shape, lambda i: (0, 0))

    w_bytes = sum(int(a.size) * a.dtype.itemsize for a in packed.values())
    cost = pl.CostEstimate(
        flops=2 * b_pad * (K * HIDDEN + HIDDEN * HIDDEN + HIDDEN * action_size),
        transcendentals=0,
        bytes_accessed=b_pad * (K + action_size) * 4 + w_bytes,
    )

    out = pl.pallas_call(
        dqn_kernel,
        out_shape=jax.ShapeDtypeStruct((b_pad, action_size), jnp.float32),
        grid=(n_tiles,),
        in_specs=[
            pl.BlockSpec((tile_b, K), lambda i: (i, 0)),   # batch tile of states
            const(packed["w1"]), const(packed["b1"]),
            const(packed["w2"]), const(packed["b2"]),
            const(packed["w3"]), const(packed["b3"]),
        ],
        out_specs=pl.BlockSpec((tile_b, action_size), lambda i: (i, 0)),
        compiler_params=pltpu.CompilerParams(
            dimension_semantics=("parallel",)),            # shards batch tiles across v7x's 2 TCs
        cost_estimate=cost,
    )(x, packed["w1"], packed["b1"], packed["w2"], packed["b2"],
      packed["w3"], packed["b3"])

    return out if b_pad == B else out[:B]


def init_params(key, state_size, action_size, hidden=HIDDEN):
    """Deterministic synthetic init (PyTorch-like uniform fan-in bounds), f32 master copy."""
    ks = jax.random.split(key, 6)

    def lin(kw, kb, fan_in, fan_out):
        bound = 1.0 / jnp.sqrt(fan_in)
        w = jax.random.uniform(kw, (fan_in, fan_out), jnp.float32, -bound, bound)
        b = jax.random.uniform(kb, (1, fan_out), jnp.float32, -bound, bound)
        return w, b

    w1, b1 = lin(ks[0], ks[1], state_size, hidden)
    w2, b2 = lin(ks[2], ks[3], hidden, hidden)
    w3, b3 = lin(ks[4], ks[5], hidden, action_size)
    return {"w1": w1, "b1": b1, "w2": w2, "b2": b2, "w3": w3, "b3": b3}


def dqn_reference_f32(x, p):
    h1 = jnp.maximum(x @ p["w1"] + p["b1"], 0.0)
    h2 = jnp.maximum(h1 @ p["w2"] + p["b2"], 0.0)
    return h2 @ p["w3"] + p["b3"]


def dqn_reference_bf16(x, p):
    """Reference matching the kernel arithmetic: bf16 MXU operands, f32 accumulation."""
    bf, f32 = jnp.bfloat16, jnp.float32
    h1 = jnp.maximum(
        jnp.dot(x.astype(bf), p["w1"].astype(bf), preferred_element_type=f32) + p["b1"], 0.0)
    h2 = jnp.maximum(
        jnp.dot(h1.astype(bf), p["w2"].astype(bf), preferred_element_type=f32) + p["b2"], 0.0)
    return jnp.dot(h2.astype(bf), p["w3"].astype(bf), preferred_element_type=f32) + p["b3"]


if __name__ == "__main__":
    # CartPole-v1: state_size = 4, action_size = 2.
    state_size, action_size = 4, 2
    key = jax.random.PRNGKey(0)
    kx, kp, kx2, kx3 = jax.random.split(key, 4)
    params = init_params(kp, state_size, action_size)
    packed = pack_params(params)   # one-time weight packing (bf16 + (1,N) biases)

    # Replay-style batch, B=256: whole batch in ONE grid step (tile_b=256).
    x = jax.random.normal(kx, (256, state_size), jnp.float32)
    out = jax.block_until_ready(dqn_forward(x, packed))
    assert out.shape == (256, action_size)
    assert jnp.allclose(out, dqn_reference_bf16(x, params), atol=1e-4, rtol=1e-4)
    assert float(jnp.max(jnp.abs(out - dqn_reference_f32(x, params)))) < 5e-2

    # Larger batch, B=512: exactly 2 even grid steps (one tile per TensorCore on v7x).
    x_big = jax.random.normal(kx3, (512, state_size), jnp.float32)
    out_big = jax.block_until_ready(dqn_forward(x_big, packed))
    assert out_big.shape == (512, action_size)
    assert jnp.allclose(out_big, dqn_reference_bf16(x_big, params), atol=1e-4, rtol=1e-4)

    # Per-step action-selection batch, B=3: pads only to 8 rows (not 128).
    x_small = jax.random.normal(kx2, (3, state_size), jnp.float32)
    out_small = jax.block_until_ready(dqn_forward(x_small, packed))
    assert out_small.shape == (3, action_size)
    assert jnp.allclose(out_small, dqn_reference_bf16(x_small, params), atol=1e-4, rtol=1e-4)

    print("KERNEL_OK")
</pallas_src>

<mosaic_0001>
module attributes {stable_mosaic.version = 11 : i64} {
  func.func @dqn_kernel(%arg0: i32, %arg1: memref<256x4xf32, #tpu.memory_space<vmem>>, %arg2: memref<4x128xbf16, #tpu.memory_space<vmem>>, %arg3: memref<1x128xf32, #tpu.memory_space<vmem>>, %arg4: memref<128x128xbf16, #tpu.memory_space<vmem>>, %arg5: memref<1x128xf32, #tpu.memory_space<vmem>>, %arg6: memref<128x2xbf16, #tpu.memory_space<vmem>>, %arg7: memref<1x2xf32, #tpu.memory_space<vmem>>, %arg8: memref<256x2xf32, #tpu.memory_space<vmem>>) attributes {dimension_semantics = [#tpu.dimension_semantics<parallel>], iteration_bounds = array<i64: 1>, scalar_prefetch = 0 : i64, scratch_operands = 0 : i64, tpu.core_type = #tpu.core_type<tc>, window_params = [{transform_indices = @transform_0, window_bounds = array<i64: 256, 4>}, {pipeline_mode = #tpu.pipeline_mode<synchronous>, transform_indices = @transform_1, window_bounds = array<i64: 4, 128>}, {pipeline_mode = #tpu.pipeline_mode<synchronous>, transform_indices = @transform_2, window_bounds = array<i64: 1, 128>}, {pipeline_mode = #tpu.pipeline_mode<synchronous>, transform_indices = @transform_3, window_bounds = array<i64: 128, 128>}, {pipeline_mode = #tpu.pipeline_mode<synchronous>, transform_indices = @transform_4, window_bounds = array<i64: 1, 128>}, {pipeline_mode = #tpu.pipeline_mode<synchronous>, transform_indices = @transform_5, window_bounds = array<i64: 128, 2>}, {pipeline_mode = #tpu.pipeline_mode<synchronous>, transform_indices = @transform_6, window_bounds = array<i64: 1, 2>}, {transform_indices = @transform_7, window_bounds = array<i64: 256, 2>}]} {
    %c0 = arith.constant 0 : index
    %c0_0 = arith.constant 0 : index
    %0 = vector.load %arg1[%c0, %c0_0] : memref<256x4xf32, #tpu.memory_space<vmem>>, vector<256x4xf32>
    %1 = arith.truncf %0 : vector<256x4xf32> to vector<256x4xbf16>
    %c0_1 = arith.constant 0 : index
    %c0_2 = arith.constant 0 : index
    %2 = vector.load %arg2[%c0_1, %c0_2] : memref<4x128xbf16, #tpu.memory_space<vmem>>, vector<4x128xbf16>
    %cst = arith.constant dense<0.000000e+00> : vector<256x128xf32>
    %3 = tpu.matmul %1, %2, %cst {dimension_numbers = #tpu.dot_dimension_numbers<[1], [0], [0], [1], [0, 0, 1, 1], [], []>} : vector<256x4xbf16>, vector<4x128xbf16>, vector<256x128xf32> -> vector<256x128xf32>
    %c0_3 = arith.constant 0 : index
    %c0_4 = arith.constant 0 : index
    %4 = vector.load %arg3[%c0_3, %c0_4] : memref<1x128xf32, #tpu.memory_space<vmem>>, vector<1x128xf32>
    %5 = vector.broadcast %4 : vector<1x128xf32> to vector<256x128xf32>
    %6 = arith.addf %3, %5 : vector<256x128xf32>
    %cst_5 = arith.constant 0.000000e+00 : f32
    %7 = vector.broadcast %cst_5 : f32 to vector<256x128xf32>
    %8 = arith.maximumf %6, %7 : vector<256x128xf32>
    %9 = arith.truncf %8 : vector<256x128xf32> to vector<256x128xbf16>
    %c0_6 = arith.constant 0 : index
    %c0_7 = arith.constant 0 : index
    %10 = vector.load %arg4[%c0_6, %c0_7] : memref<128x128xbf16, #tpu.memory_space<vmem>>, vector<128x128xbf16>
    %cst_8 = arith.constant dense<0.000000e+00> : vector<256x128xf32>
    %11 = tpu.matmul %9, %10, %cst_8 {dimension_numbers = #tpu.dot_dimension_numbers<[1], [0], [0], [1], [0, 0, 1, 1], [], []>} : vector<256x128xbf16>, vector<128x128xbf16>, vector<256x128xf32> -> vector<256x128xf32>
    %c0_9 = arith.constant 0 : index
    %c0_10 = arith.constant 0 : index
    %12 = vector.load %arg5[%c0_9, %c0_10] : memref<1x128xf32, #tpu.memory_space<vmem>>, vector<1x128xf32>
    %13 = vector.broadcast %12 : vector<1x128xf32> to vector<256x128xf32>
    %14 = arith.addf %11, %13 : vector<256x128xf32>
    %cst_11 = arith.constant 0.000000e+00 : f32
    %15 = vector.broadcast %cst_11 : f32 to vector<256x128xf32>
    %16 = arith.maximumf %14, %15 : vector<256x128xf32>
    %17 = arith.truncf %16 : vector<256x128xf32> to vector<256x128xbf16>
    %c0_12 = arith.constant 0 : index
    %c0_13 = arith.constant 0 : index
    %18 = vector.load %arg6[%c0_12, %c0_13] : memref<128x2xbf16, #tpu.memory_space<vmem>>, vector<128x2xbf16>
    %cst_14 = arith.constant dense<0.000000e+00> : vector<256x2xf32>
    %19 = tpu.matmul %17, %18, %cst_14 {dimension_numbers = #tpu.dot_dimension_numbers<[1], [0], [0], [1], [0, 0, 1, 1], [], []>} : vector<256x128xbf16>, vector<128x2xbf16>, vector<256x2xf32> -> vector<256x2xf32>
    %c0_15 = arith.constant 0 : index
    %c0_16 = arith.constant 0 : index
    %20 = vector.load %arg7[%c0_15, %c0_16] : memref<1x2xf32, #tpu.memory_space<vmem>>, vector<1x2xf32>
    %21 = vector.broadcast %20 : vector<1x2xf32> to vector<256x2xf32>
    %22 = arith.addf %19, %21 : vector<256x2xf32>
    %c0_17 = arith.constant 0 : index
    %c0_18 = arith.constant 0 : index
    %23 = vector.load %arg8[%c0_17, %c0_18] : memref<256x2xf32, #tpu.memory_space<vmem>>, vector<256x2xf32>
    tpu.vector_store %arg8[%c0_17, %c0_18], %22 {strides = array<i32>} : memref<256x2xf32, #tpu.memory_space<vmem>>, vector<256x2xf32>,
    return
  }
  func.func @transform_0(%arg0: i32) -> (i32, i32) {
    %c0_i32 = arith.constant 0 : i32
    %c0_i32_0 = arith.constant 0 : i32
    return %arg0, %c0_i32 : i32, i32
  }
  func.func @transform_1(%arg0: i32) -> (i32, i32) {
    %c0_i32 = arith.constant 0 : i32
    %c0_i32_0 = arith.constant 0 : i32
    %c0_i32_1 = arith.constant 0 : i32
    return %c0_i32, %c0_i32_0 : i32, i32
  }
  func.func @transform_2(%arg0: i32) -> (i32, i32) {
    %c0_i32 = arith.constant 0 : i32
    %c0_i32_0 = arith.constant 0 : i32
    %c0_i32_1 = arith.constant 0 : i32
    return %c0_i32, %c0_i32_0 : i32, i32
  }
  func.func @transform_3(%arg0: i32) -> (i32, i32) {
    %c0_i32 = arith.constant 0 : i32
    %c0_i32_0 = arith.constant 0 : i32
    %c0_i32_1 = arith.constant 0 : i32
    return %c0_i32, %c0_i32_0 : i32, i32
  }
  func.func @transform_4(%arg0: i32) -> (i32, i32) {
    %c0_i32 = arith.constant 0 : i32
    %c0_i32_0 = arith.constant 0 : i32
    %c0_i32_1 = arith.constant 0 : i32
    return %c0_i32, %c0_i32_0 : i32, i32
  }
  func.func @transform_5(%arg0: i32) -> (i32, i32) {
    %c0_i32 = arith.constant 0 : i32
    %c0_i32_0 = arith.constant 0 : i32
    %c0_i32_1 = arith.constant 0 : i32
    return %c0_i32, %c0_i32_0 : i32, i32
  }
  func.func @transform_6(%arg0: i32) -> (i32, i32) {
    %c0_i32 = arith.constant 0 : i32
    %c0_i32_0 = arith.constant 0 : i32
    %c0_i32_1 = arith.constant 0 : i32
    return %c0_i32, %c0_i32_0 : i32, i32
  }
  func.func @transform_7(%arg0: i32) -> (i32, i32) {
    %c0_i32 = arith.constant 0 : i32
    %c0_i32_0 = arith.constant 0 : i32
    return %arg0, %c0_i32 : i32, i32
  }
}

</mosaic_0001>

<llo_original>
// kernel: dqn_forward.1
$region0: #{dqn_forward.1}
  #allocation0 [shape = 'u32[]', space=smem, size = 0x4, offset = 0x4, fixed_abs, tag = 'smem constant byte address 0x4 - core index']
  #allocation1 [shape = 'u32[144,128]{1,0:T(1,128)}', space=vmem, size = 0x12000, scoped, tag = 'internal scratch']
  %s0 = inlined_call_operand.vmem [shape: f32[256,4], index: 0, kind: input, shape index: {}]
  %s1 = inlined_call_operand.vmem [shape: bf16[4,128], index: 1, kind: input, shape index: {}]
  %s2 = inlined_call_operand.vmem [shape: f32[1,128], index: 2, kind: input, shape index: {}]
  %s3 = inlined_call_operand.vmem [shape: bf16[128,128], index: 3, kind: input, shape index: {}]
  %s4 = inlined_call_operand.vmem [shape: f32[1,128], index: 4, kind: input, shape index: {}]
  %s5 = inlined_call_operand.vmem [shape: bf16[128,2], index: 5, kind: input, shape index: {}]
  %s6 = inlined_call_operand.vmem [shape: f32[1,2], index: 6, kind: input, shape index: {}]
  %s7 = inlined_call_operand.vmem [shape: f32[256,2], index: 7, kind: output, shape index: {}]
  %s8 = sld [smem:[#allocation0]]
  $region38: #{dqn_forward.1} parent=0
    _
  %s10 = ssub.s32 1, %s8
  %s11 = scalar_select 0, %s10, %s8
  // Predicated region
  $region2: #{dqn_forward.1} parent=0 // pred_check
    _
  $region3: #{dqn_forward.1} parent=0 // pred_check_branch
    %13 = sbr.rel (0) target = $region5
  $region4: #{dqn_forward.1} parent=0 // pred_region
    _
  $region5: #{dqn_forward.1} parent=0 // pred_fallthru
    _
  // Predicated region
  $region6: #{dqn_forward.1} parent=0 // pred_check
    _
  $region7: #{dqn_forward.1} parent=0 // pred_check_branch
    %15 = sbr.rel (0) target = $region9
  $region8: #{dqn_forward.1} parent=0 // pred_region
    _
  $region9: #{dqn_forward.1} parent=0 // pred_fallthru
    _
  // Predicated region
  $region10: #{dqn_forward.1} parent=0 // pred_check
    _
  $region11: #{dqn_forward.1} parent=0 // pred_check_branch
    %17 = sbr.rel (0) target = $region13
  $region12: #{dqn_forward.1} parent=0 // pred_region
    _
  $region13: #{dqn_forward.1} parent=0 // pred_fallthru
    _
  // Predicated region
  $region14: #{dqn_forward.1} parent=0 // pred_check
    _
  $region15: #{dqn_forward.1} parent=0 // pred_check_branch
    %19 = sbr.rel (0) target = $region17
  $region16: #{dqn_forward.1} parent=0 // pred_region
    _
  $region17: #{dqn_forward.1} parent=0 // pred_fallthru
    _
  // Predicated region
  $region18: #{dqn_forward.1} parent=0 // pred_check
    _
  $region19: #{dqn_forward.1} parent=0 // pred_check_branch
    %21 = sbr.rel (0) target = $region21
  $region20: #{dqn_forward.1} parent=0 // pred_region
    _
  $region21: #{dqn_forward.1} parent=0 // pred_fallthru
    _
  // Predicated region
  $region22: #{dqn_forward.1} parent=0 // pred_check
    _
  $region23: #{dqn_forward.1} parent=0 // pred_check_branch
    %23 = sbr.rel (0) target = $region25
  $region24: #{dqn_forward.1} parent=0 // pred_region
    _
  $region25: #{dqn_forward.1} parent=0 // pred_fallthru
    _
  // Predicated region
  $region26: #{dqn_forward.1} parent=0 // pred_check
    _
  $region27: #{dqn_forward.1} parent=0 // pred_check_branch
    %25 = sbr.rel (0) target = $region29
  $region28: #{dqn_forward.1} parent=0 // pred_region
    _
  $region29: #{dqn_forward.1} parent=0 // pred_fallthru
    _
  %v27 = vld [vmem:[%s0] sm:$0xff]
  %v28 = vld [vmem:[%s0 + $0x8] sm:$0xff]
  %v29 = vld [vmem:[%s0 + $0x10] sm:$0xff]
  %v30 = vld [vmem:[%s0 + $0x18] sm:$0xff]
  %v31 = vld [vmem:[%s0 + $0x20] sm:$0xff]
  %v32 = vld [vmem:[%s0 + $0x28] sm:$0xff]
  %v33 = vld [vmem:[%s0 + $0x30] sm:$0xff]
  %v34 = vld [vmem:[%s0 + $0x38] sm:$0xff]
  %v35 = vld [vmem:[%s0 + $0x40] sm:$0xff]
  %v36 = vld [vmem:[%s0 + $0x48] sm:$0xff]
  %v37 = vld [vmem:[%s0 + $0x50] sm:$0xff]
  %v38 = vld [vmem:[%s0 + $0x58] sm:$0xff]
  %v39 = vld [vmem:[%s0 + $0x60] sm:$0xff]
  %v40 = vld [vmem:[%s0 + $0x68] sm:$0xff]
  %v41 = vld [vmem:[%s0 + $0x70] sm:$0xff]
  %v42 = vld [vmem:[%s0 + $0x78] sm:$0xff]
  %v43 = vld [vmem:[%s0 + $0x80] sm:$0xff]
  %v44 = vld [vmem:[%s0 + $0x88] sm:$0xff]
  %v45 = vld [vmem:[%s0 + $0x90] sm:$0xff]
  %v46 = vld [vmem:[%s0 + $0x98] sm:$0xff]
  %v47 = vld [vmem:[%s0 + $0xa0] sm:$0xff]
  %v48 = vld [vmem:[%s0 + $0xa8] sm:$0xff]
  %v49 = vld [vmem:[%s0 + $0xb0] sm:$0xff]
  %v50 = vld [vmem:[%s0 + $0xb8] sm:$0xff]
  %v51 = vld [vmem:[%s0 + $0xc0] sm:$0xff]
  %v52 = vld [vmem:[%s0 + $0xc8] sm:$0xff]
  %v53 = vld [vmem:[%s0 + $0xd0] sm:$0xff]
  %v54 = vld [vmem:[%s0 + $0xd8] sm:$0xff]
  %v55 = vld [vmem:[%s0 + $0xe0] sm:$0xff]
  %v56 = vld [vmem:[%s0 + $0xe8] sm:$0xff]
  %v57 = vld [vmem:[%s0 + $0xf0] sm:$0xff]
  %v58 = vld [vmem:[%s0 + $0xf8] sm:$0xff]
  %v59 = vpack.c.bf16 %v28, %v27
  %v60 = vpack.c.bf16 %v30, %v29
  %v61 = vpack.c.bf16 %v32, %v31
  %v62 = vpack.c.bf16 %v34, %v33
  %v63 = vpack.c.bf16 %v36, %v35
  %v64 = vpack.c.bf16 %v38, %v37
  %v65 = vpack.c.bf16 %v40, %v39
  %v66 = vpack.c.bf16 %v42, %v41
  %v67 = vpack.c.bf16 %v44, %v43
  %v68 = vpack.c.bf16 %v46, %v45
  %v69 = vpack.c.bf16 %v48, %v47
  %v70 = vpack.c.bf16 %v50, %v49
  %v71 = vpack.c.bf16 %v52, %v51
  %v72 = vpack.c.bf16 %v54, %v53
  %v73 = vpack.c.bf16 %v56, %v55
  %v74 = vpack.c.bf16 %v58, %v57
  %v75 = vld [vmem:[%s1] sm:$0x3]
  %v76 = vld [vmem:[%s2] sm:$0x1]
  %v78 = vlaneseq
  %v79 = vshrl.u32 %v78, 7
  %v80 = vsub.s32 0, %v79
  %v81 = vrot.slane %v76, %v80
  %vm83 = vcmask 31744
  %v85 = vsel %vm83, %v59, 0
  %v88 = vsel %vm83, %v60, 0
  %v91 = vsel %vm83, %v61, 0
  %v94 = vsel %vm83, %v62, 0
  %v97 = vsel %vm83, %v63, 0
  %v100 = vsel %vm83, %v64, 0
  %v103 = vsel %vm83, %v65, 0
  %v106 = vsel %vm83, %v66, 0
  %v109 = vsel %vm83, %v67, 0
  %v112 = vsel %vm83, %v68, 0
  %v115 = vsel %vm83, %v69, 0
  %v118 = vsel %vm83, %v70, 0
  %v121 = vsel %vm83, %v71, 0
  %v124 = vsel %vm83, %v72, 0
  %v127 = vsel %vm83, %v73, 0
  %v130 = vsel %vm83, %v74, 0
  %vm132 = vcmask 1041408
  %v134 = vsel %vm132, %v75, 0
  %136 = vmatprep.subr.bf16.mxu0 0
  %137 = vmatpush1.bf16.msra.mxu0 %v134
  %138 = vmatprep.subr.bf16.mxu0 0
  %139 = vmatpush1.bf16.msra.mxu0 0
  %140 = vmatprep.subr.bf16.mxu0 0
  %141 = vmatpush1.bf16.msra.mxu0 0
  %142 = vmatprep.subr.bf16.mxu0 0
  %143 = vmatpush1.bf16.msra.mxu0 0
  %144 = vmatprep.subr.bf16.mxu0 0
  %145 = vmatpush1.bf16.msra.mxu0 0
  %146 = vmatprep.subr.bf16.mxu0 0
  %147 = vmatpush1.bf16.msra.mxu0 0
  %148 = vmatprep.subr.bf16.mxu0 0
  %149 = vmatpush1.bf16.msra.mxu0 0
  %150 = vmatprep.subr.bf16.mxu0 0
  %151 = vmatpush1.bf16.msra.mxu0 0
  %152 = vmatprep.subr.bf16.mxu0 0
  %153 = vmatpush1.bf16.msra.mxu0 0
  %154 = vmatprep.subr.bf16.mxu0 0
  %155 = vmatpush1.bf16.msra.mxu0 0
  %156 = vmatprep.subr.bf16.mxu0 0
  %157 = vmatpush1.bf16.msra.mxu0 0
  %158 = vmatprep.subr.bf16.mxu0 0
  %159 = vmatpush1.bf16.msra.mxu0 0
  %160 = vmatprep.subr.bf16.mxu0 0
  %161 = vmatpush1.bf16.msra.mxu0 0
  %162 = vmatprep.subr.bf16.mxu0 0
  %163 = vmatpush1.bf16.msra.mxu0 0
  %164 = vmatprep.subr.bf16.mxu0 0
  %165 = vmatpush1.bf16.msra.mxu0 0
  %166 = vmatprep.subr.bf16.mxu0 0
  %167 = vmatpush1.bf16.msra.mxu0 0
  %168 = vmatprep.mubr.bf16.mxu0 0
  %169 = vmatmul.mubr.bf16.gmra.mrb[0].mxu0 %v85
  %v170 = vpop.f32.mrb[0].mxu0
  %v171 = vadd.f32 %v81, %v170
  %v172 = vpop.f32.mrb[0].mxu0
  %v173 = vpop.f32.mrb[0].mxu0
  %v174 = vadd.f32 %v81, %v173
  %v175 = vpop.f32.mrb[0].mxu0
  %176 = vmatprep.mubr.bf16.mxu0 0
  %177 = vmatmul.mubr.bf16.gmra.mrb[0].mxu0 %v88
  %v178 = vpop.f32.mrb[0].mxu0
  %v179 = vadd.f32 %v81, %v178
  %v180 = vpop.f32.mrb[0].mxu0
  %v181 = vpop.f32.mrb[0].mxu0
  %v182 = vadd.f32 %v81, %v181
  %v183 = vpop.f32.mrb[0].mxu0
  %184 = vmatprep.mubr.bf16.mxu0 0
  %185 = vmatmul.mubr.bf16.gmra.mrb[0].mxu0 %v91
  %v186 = vpop.f32.mrb[0].mxu0
  %v187 = vadd.f32 %v81, %v186
  %v188 = vpop.f32.mrb[0].mxu0
  %v189 = vpop.f32.mrb[0].mxu0
  %v190 = vadd.f32 %v81, %v189
  %v191 = vpop.f32.mrb[0].mxu0
  %192 = vmatprep.mubr.bf16.mxu0 0
  %193 = vmatmul.mubr.bf16.gmra.mrb[0].mxu0 %v94
  %v194 = vpop.f32.mrb[0].mxu0
  %v195 = vadd.f32 %v81, %v194
  %v196 = vpop.f32.mrb[0].mxu0
  %v197 = vpop.f32.mrb[0].mxu0
  %v198 = vadd.f32 %v81, %v197
  %v199 = vpop.f32.mrb[0].mxu0
  %200 = vmatprep.mubr.bf16.mxu0 0
  %201 = vmatmul.mubr.bf16.gmra.mrb[0].mxu0 %v97
  %v202 = vpop.f32.mrb[0].mxu0
  %v203 = vadd.f32 %v81, %v202
  %v204 = vpop.f32.mrb[0].mxu0
  %v205 = vpop.f32.mrb[0].mxu0
  %v206 = vadd.f32 %v81, %v205
  %v207 = vpop.f32.mrb[0].mxu0
  %208 = vmatprep.mubr.bf16.mxu0 0
  %209 = vmatmul.mubr.bf16.gmra.mrb[0].mxu0 %v100
  %v210 = vpop.f32.mrb[0].mxu0
  %v211 = vadd.f32 %v81, %v210
  %v212 = vpop.f32.mrb[0].mxu0
  %v213 = vpop.f32.mrb[0].mxu0
  %v214 = vadd.f32 %v81, %v213
  %v215 = vpop.f32.mrb[0].mxu0
  %216 = vmatprep.mubr.bf16.mxu0 0
  %217 = vmatmul.mubr.bf16.gmra.mrb[0].mxu0 %v103
  %v218 = vpop.f32.mrb[0].mxu0
  %v219 = vadd.f32 %v81, %v218
  %v220 = vpop.f32.mrb[0].mxu0
  %v221 = vpop.f32.mrb[0].mxu0
  %v222 = vadd.f32 %v81, %v221
  %v223 = vpop.f32.mrb[0].mxu0
  %224 = vmatprep.mubr.bf16.mxu0 0
  %225 = vmatmul.mubr.bf16.gmra.mrb[0].mxu0 %v106
  %v226 = vpop.f32.mrb[0].mxu0
  %v227 = vadd.f32 %v81, %v226
  %v228 = vpop.f32.mrb[0].mxu0
  %v229 = vpop.f32.mrb[0].mxu0
  %v230 = vadd.f32 %v81, %v229
  %v231 = vpop.f32.mrb[0].mxu0
  %232 = vmatprep.mubr.bf16.mxu0 0
  %233 = vmatmul.mubr.bf16.gmra.mrb[0].mxu0 %v109
  %v234 = vpop.f32.mrb[0].mxu0
  %v235 = vadd.f32 %v81, %v234
  %v236 = vpop.f32.mrb[0].mxu0
  %v237 = vpop.f32.mrb[0].mxu0
  %v238 = vadd.f32 %v81, %v237
  %v239 = vpop.f32.mrb[0].mxu0
  %240 = vmatprep.mubr.bf16.mxu0 0
  %241 = vmatmul.mubr.bf16.gmra.mrb[0].mxu0 %v112
  %v242 = vpop.f32.mrb[0].mxu0
  %v243 = vadd.f32 %v81, %v242
  %v244 = vpop.f32.mrb[0].mxu0
  %v245 = vpop.f32.mrb[0].mxu0
  %v246 = vadd.f32 %v81, %v245
  %v247 = vpop.f32.mrb[0].mxu0
  %248 = vmatprep.mubr.bf16.mxu0 0
  %249 = vmatmul.mubr.bf16.gmra.mrb[0].mxu0 %v115
  %v250 = vpop.f32.mrb[0].mxu0
  %v251 = vadd.f32 %v81, %v250
  %v252 = vpop.f32.mrb[0].mxu0
  %v253 = vpop.f32.mrb[0].mxu0
  %v254 = vadd.f32 %v81, %v253
  %v255 = vpop.f32.mrb[0].mxu0
  %256 = vmatprep.mubr.bf16.mxu0 0
  %257 = vmatmul.mubr.bf16.gmra.mrb[0].mxu0 %v118
  %v258 = vpop.f32.mrb[0].mxu0
  %v259 = vadd.f32 %v81, %v258
  %v260 = vpop.f32.mrb[0].mxu0
  %v261 = vpop.f32.mrb[0].mxu0
  %v262 = vadd.f32 %v81, %v261
  %v263 = vpop.f32.mrb[0].mxu0
  %264 = vmatprep.mubr.bf16.mxu0 0
  %265 = vmatmul.mubr.bf16.gmra.mrb[0].mxu0 %v121
  %v266 = vpop.f32.mrb[0].mxu0
  %v267 = vadd.f32 %v81, %v266
  %v268 = vpop.f32.mrb[0].mxu0
  %v269 = vpop.f32.mrb[0].mxu0
  %v270 = vadd.f32 %v81, %v269
  %v271 = vpop.f32.mrb[0].mxu0
  %272 = vmatprep.mubr.bf16.mxu0 0
  %273 = vmatmul.mubr.bf16.gmra.mrb[0].mxu0 %v124
  %v274 = vpop.f32.mrb[0].mxu0
  %v275 = vadd.f32 %v81, %v274
  %v276 = vpop.f32.mrb[0].mxu0
  %v277 = vpop.f32.mrb[0].mxu0
  %v278 = vadd.f32 %v81, %v277
  %v279 = vpop.f32.mrb[0].mxu0
  %280 = vmatprep.mubr.bf16.mxu0 0
  %281 = vmatmul.mubr.bf16.gmra.mrb[0].mxu0 %v127
  %v282 = vpop.f32.mrb[0].mxu0
  %v283 = vadd.f32 %v81, %v282
  %v284 = vpop.f32.mrb[0].mxu0
  %v285 = vpop.f32.mrb[0].mxu0
  %v286 = vadd.f32 %v81, %v285
  %v287 = vpop.f32.mrb[0].mxu0
  %288 = vmatprep.mubr.bf16.mxu0 0
  %289 = vmatmul.mubr.bf16.gmra.mrb[0].mxu0 %v130
  %v290 = vpop.f32.mrb[0].mxu0
  %v291 = vadd.f32 %v81, %v290
  %v292 = vpop.f32.mrb[0].mxu0
  %v293 = vpop.f32.mrb[0].mxu0
  %v294 = vadd.f32 %v81, %v293
  %v295 = vpop.f32.mrb[0].mxu0
  %296 = vdwg.mxu0
  %v297 = vmax.f32 %v171, 0.0
  %v298 = vmax.f32 %v174, 0.0
  %v299 = vmax.f32 %v179, 0.0
  %v300 = vmax.f32 %v182, 0.0
  %v301 = vmax.f32 %v187, 0.0
  %v302 = vmax.f32 %v190, 0.0
  %v303 = vmax.f32 %v195, 0.0
  %v304 = vmax.f32 %v198, 0.0
  %v305 = vmax.f32 %v203, 0.0
  %v306 = vmax.f32 %v206, 0.0
  %v307 = vmax.f32 %v211, 0.0
  %v308 = vmax.f32 %v214, 0.0
  %v309 = vmax.f32 %v219, 0.0
  %v310 = vmax.f32 %v222, 0.0
  %v311 = vmax.f32 %v227, 0.0
  %v312 = vmax.f32 %v230, 0.0
  %v313 = vmax.f32 %v235, 0.0
  %v314 = vmax.f32 %v238, 0.0
  %v315 = vmax.f32 %v243, 0.0
  %v316 = vmax.f32 %v246, 0.0
  %v317 = vmax.f32 %v251, 0.0
  %v318 = vmax.f32 %v254, 0.0
  %v319 = vmax.f32 %v259, 0.0
  %v320 = vmax.f32 %v262, 0.0
  %v321 = vmax.f32 %v267, 0.0
  %v322 = vmax.f32 %v270, 0.0
  %v323 = vmax.f32 %v275, 0.0
  %v324 = vmax.f32 %v278, 0.0
  %v325 = vmax.f32 %v283, 0.0
  %v326 = vmax.f32 %v286, 0.0
  %v327 = vmax.f32 %v291, 0.0
  %v328 = vmax.f32 %v294, 0.0
  %v329 = vpack.c.bf16 %v298, %v297
  %v330 = vpack.c.bf16 %v300, %v299
  %v331 = vpack.c.bf16 %v302, %v301
  %v332 = vpack.c.bf16 %v304, %v303
  %v333 = vpack.c.bf16 %v306, %v305
  %v334 = vpack.c.bf16 %v308, %v307
  %v335 = vpack.c.bf16 %v310, %v309
  %v336 = vpack.c.bf16 %v312, %v311
  %v337 = vpack.c.bf16 %v314, %v313
  %v338 = vpack.c.bf16 %v316, %v315
  %v339 = vpack.c.bf16 %v318, %v317
  %v340 = vpack.c.bf16 %v320, %v319
  %v341 = vpack.c.bf16 %v322, %v321
  %v342 = vpack.c.bf16 %v324, %v323
  %v343 = vpack.c.bf16 %v326, %v325
  %v344 = vpack.c.bf16 %v328, %v327
  %v345 = vld [vmem:[%s3] sm:$0xf]
  %v346 = vld [vmem:[%s3 + $0x4] sm:$0xf]
  %v347 = vld [vmem:[%s3 + $0x8] sm:$0xf]
  %v348 = vld [vmem:[%s3 + $0xc] sm:$0xf]
  %v349 = vld [vmem:[%s3 + $0x10] sm:$0xf]
  %v350 = vld [vmem:[%s3 + $0x14] sm:$0xf]
  %v351 = vld [vmem:[%s3 + $0x18] sm:$0xf]
  %v352 = vld [vmem:[%s3 + $0x1c] sm:$0xf]
  %v353 = vld [vmem:[%s3 + $0x20] sm:$0xf]
  %v354 = vld [vmem:[%s3 + $0x24] sm:$0xf]
  %v355 = vld [vmem:[%s3 + $0x28] sm:$0xf]
  %v356 = vld [vmem:[%s3 + $0x2c] sm:$0xf]
  %v357 = vld [vmem:[%s3 + $0x30] sm:$0xf]
  %v358 = vld [vmem:[%s3 + $0x34] sm:$0xf]
  %v359 = vld [vmem:[%s3 + $0x38] sm:$0xf]
  %v360 = vld [vmem:[%s3 + $0x3c] sm:$0xf]
  %v361 = vld [vmem:[%s4] sm:$0x1]
  %v363 = vlaneseq
  %v364 = vshrl.u32 %v363, 7
  %v365 = vsub.s32 0, %v364
  %v366 = vrot.slane %v361, %v365
  %v384 = vunpack.c.l.b16 %v345
  %v385 = vunpack.c.l.b16 %v346
  %v386 = vunpack.c.l.b16 %v347
  %v387 = vunpack.c.l.b16 %v348
  %v388 = vunpack.c.l.b16 %v349
  %v389 = vunpack.c.l.b16 %v350
  %v390 = vunpack.c.l.b16 %v351
  %v391 = vunpack.c.l.b16 %v352
  %v392 = vunpack.c.l.b16 %v353
  %v393 = vunpack.c.l.b16 %v354
  %v394 = vunpack.c.l.b16 %v355
  %v395 = vunpack.c.l.b16 %v356
  %v396 = vunpack.c.l.b16 %v357
  %v397 = vunpack.c.l.b16 %v358
  %v398 = vunpack.c.l.b16 %v359
  %v399 = vunpack.c.l.b16 %v360
  %v400 = vpack.c.b16 %v385, %v384
  %v401 = vpack.c.b16 %v387, %v386
  %v402 = vpack.c.b16 %v389, %v388
  %v403 = vpack.c.b16 %v391, %v390
  %v404 = vpack.c.b16 %v393, %v392
  %v405 = vpack.c.b16 %v395, %v394
  %v406 = vpack.c.b16 %v397, %v396
  %v407 = vpack.c.b16 %v399, %v398
  %416 = vmatprep.subr.bf16.mxu0 0
  %417 = vmatpush1.bf16.msra.mxu0 %v400
  %418 = vmatprep.subr.bf16.mxu0 0
  %419 = vmatpush1.bf16.msra.mxu0 %v401
  %420 = vmatprep.subr.bf16.mxu0 0
  %421 = vmatpush1.bf16.msra.mxu0 %v402
  %422 = vmatprep.subr.bf16.mxu0 0
  %423 = vmatpush1.bf16.msra.mxu0 %v403
  %424 = vmatprep.subr.bf16.mxu0 0
  %425 = vmatpush1.bf16.msra.mxu0 %v404
  %426 = vmatprep.subr.bf16.mxu0 0
  %427 = vmatpush1.bf16.msra.mxu0 %v405
  %428 = vmatprep.subr.bf16.mxu0 0
  %429 = vmatpush1.bf16.msra.mxu0 %v406
  %430 = vmatprep.subr.bf16.mxu0 0
  %431 = vmatpush1.bf16.msra.mxu0 %v407
  %432 = vmatprep.subr.bf16.mxu0 0
  %433 = vmatpush1.bf16.msra.mxu0 0
  %434 = vmatprep.subr.bf16.mxu0 0
  %435 = vmatpush1.bf16.msra.mxu0 0
  %436 = vmatprep.subr.bf16.mxu0 0
  %437 = vmatpush1.bf16.msra.mxu0 0
  %438 = vmatprep.subr.bf16.mxu0 0
  %439 = vmatpush1.bf16.msra.mxu0 0
  %440 = vmatprep.subr.bf16.mxu0 0
  %441 = vmatpush1.bf16.msra.mxu0 0
  %442 = vmatprep.subr.bf16.mxu0 0
  %443 = vmatpush1.bf16.msra.mxu0 0
  %444 = vmatprep.subr.bf16.mxu0 0
  %445 = vmatpush1.bf16.msra.mxu0 0
  %446 = vmatprep.subr.bf16.mxu0 0
  %447 = vmatpush1.bf16.msra.mxu0 0
  %448 = vmatprep.mubr.bf16.mxu0 0
  %449 = vmatmul.mubr.bf16.gmra.mrb[0].mxu0 %v329
  %v450 = vpop.f32.mrb[0].mxu0
  %v451 = vadd.f32 %v366, %v450
  %v452 = vpop.f32.mrb[0].mxu0
  %v453 = vpop.f32.mrb[0].mxu0
  %v454 = vadd.f32 %v366, %v453
  %v455 = vpop.f32.mrb[0].mxu0
  %456 = vmatprep.mubr.bf16.mxu0 0
  %457 = vmatmul.mubr.bf16.gmra.mrb[0].mxu0 %v330
  %v458 = vpop.f32.mrb[0].mxu0
  %v459 = vadd.f32 %v366, %v458
  %v460 = vpop.f32.mrb[0].mxu0
  %v461 = vpop.f32.mrb[0].mxu0
  %v462 = vadd.f32 %v366, %v461
  %v463 = vpop.f32.mrb[0].mxu0
  %464 = vmatprep.mubr.bf16.mxu0 0
  %465 = vmatmul.mubr.bf16.gmra.mrb[0].mxu0 %v331
  %v466 = vpop.f32.mrb[0].mxu0
  %v467 = vadd.f32 %v366, %v466
  %v468 = vpop.f32.mrb[0].mxu0
  %v469 = vpop.f32.mrb[0].mxu0
  %v470 = vadd.f32 %v366, %v469
  %v471 = vpop.f32.mrb[0].mxu0
  %472 = vmatprep.mubr.bf16.mxu0 0
  %473 = vmatmul.mubr.bf16.gmra.mrb[0].mxu0 %v332
  %v474 = vpop.f32.mrb[0].mxu0
  %v475 = vadd.f32 %v366, %v474
  %v476 = vpop.f32.mrb[0].mxu0
  %v477 = vpop.f32.mrb[0].mxu0
  %v478 = vadd.f32 %v366, %v477
  %v479 = vpop.f32.mrb[0].mxu0
  %480 = vmatprep.mubr.bf16.mxu0 0
  %481 = vmatmul.mubr.bf16.gmra.mrb[0].mxu0 %v333
  %v482 = vpop.f32.mrb[0].mxu0
  %v483 = vadd.f32 %v366, %v482
  %v484 = vpop.f32.mrb[0].mxu0
  %v485 = vpop.f32.mrb[0].mxu0
  %v486 = vadd.f32 %v366, %v485
  %v487 = vpop.f32.mrb[0].mxu0
  %488 = vmatprep.mubr.bf16.mxu0 0
  %489 = vmatmul.mubr.bf16.gmra.mrb[0].mxu0 %v334
  %v490 = vpop.f32.mrb[0].mxu0
  %v491 = vadd.f32 %v366, %v490
  %v492 = vpop.f32.mrb[0].mxu0
  %v493 = vpop.f32.mrb[0].mxu0
  %v494 = vadd.f32 %v366, %v493
  %v495 = vpop.f32.mrb[0].mxu0
  %496 = vmatprep.mubr.bf16.mxu0 0
  %497 = vmatmul.mubr.bf16.gmra.mrb[0].mxu0 %v335
  %v498 = vpop.f32.mrb[0].mxu0
  %v499 = vadd.f32 %v366, %v498
  %v500 = vpop.f32.mrb[0].mxu0
  %v501 = vpop.f32.mrb[0].mxu0
  %v502 = vadd.f32 %v366, %v501
  %v503 = vpop.f32.mrb[0].mxu0
  %504 = vmatprep.mubr.bf16.mxu0 0
  %505 = vmatmul.mubr.bf16.gmra.mrb[0].mxu0 %v336
  %v506 = vpop.f32.mrb[0].mxu0
  %v507 = vadd.f32 %v366, %v506
  %v508 = vpop.f32.mrb[0].mxu0
  %v509 = vpop.f32.mrb[0].mxu0
  %v510 = vadd.f32 %v366, %v509
  %v511 = vpop.f32.mrb[0].mxu0
  %512 = vmatprep.mubr.bf16.mxu0 0
  %513 = vmatmul.mubr.bf16.gmra.mrb[0].mxu0 %v337
  %v514 = vpop.f32.mrb[0].mxu0
  %v515 = vadd.f32 %v366, %v514
  %v516 = vpop.f32.mrb[0].mxu0
  %v517 = vpop.f32.mrb[0].mxu0
  %v518 = vadd.f32 %v366, %v517
  %v519 = vpop.f32.mrb[0].mxu0
  %520 = vmatprep.mubr.bf16.mxu0 0
  %521 = vmatmul.mubr.bf16.gmra.mrb[0].mxu0 %v338
  %v522 = vpop.f32.mrb[0].mxu0
  %v523 = vadd.f32 %v366, %v522
  %v524 = vpop.f32.mrb[0].mxu0
  %v525 = vpop.f32.mrb[0].mxu0
  %v526 = vadd.f32 %v366, %v525
  %v527 = vpop.f32.mrb[0].mxu0
  %528 = vmatprep.mubr.bf16.mxu0 0
  %529 = vmatmul.mubr.bf16.gmra.mrb[0].mxu0 %v339
  %v530 = vpop.f32.mrb[0].mxu0
  %v531 = vadd.f32 %v366, %v530
  %v532 = vpop.f32.mrb[0].mxu0
  %v533 = vpop.f32.mrb[0].mxu0
  %v534 = vadd.f32 %v366, %v533
  %v535 = vpop.f32.mrb[0].mxu0
  %536 = vmatprep.mubr.bf16.mxu0 0
  %537 = vmatmul.mubr.bf16.gmra.mrb[0].mxu0 %v340
  %v538 = vpop.f32.mrb[0].mxu0
  %v539 = vadd.f32 %v366, %v538
  %v540 = vpop.f32.mrb[0].mxu0
  %v541 = vpop.f32.mrb[0].mxu0
  %v542 = vadd.f32 %v366, %v541
  %v543 = vpop.f32.mrb[0].mxu0
  %544 = vmatprep.mubr.bf16.mxu0 0
  %545 = vmatmul.mubr.bf16.gmra.mrb[0].mxu0 %v341
  %v546 = vpop.f32.mrb[0].mxu0
  %v547 = vadd.f32 %v366, %v546
  %v548 = vpop.f32.mrb[0].mxu0
  %v549 = vpop.f32.mrb[0].mxu0
  %v550 = vadd.f32 %v366, %v549
  %v551 = vpop.f32.mrb[0].mxu0
  %552 = vmatprep.mubr.bf16.mxu0 0
  %553 = vmatmul.mubr.bf16.gmra.mrb[0].mxu0 %v342
  %v554 = vpop.f32.mrb[0].mxu0
  %v555 = vadd.f32 %v366, %v554
  %v556 = vpop.f32.mrb[0].mxu0
  %v557 = vpop.f32.mrb[0].mxu0
  %v558 = vadd.f32 %v366, %v557
  %v559 = vpop.f32.mrb[0].mxu0
  %560 = vmatprep.mubr.bf16.mxu0 0
  %561 = vmatmul.mubr.bf16.gmra.mrb[0].mxu0 %v343
  %v562 = vpop.f32.mrb[0].mxu0
  %v563 = vadd.f32 %v366, %v562
  %v564 = vpop.f32.mrb[0].mxu0
  %v565 = vpop.f32.mrb[0].mxu0
  %v566 = vadd.f32 %v366, %v565
  %v567 = vpop.f32.mrb[0].mxu0
  %568 = vmatprep.mubr.bf16.mxu0 0
  %569 = vmatmul.mubr.bf16.gmra.mrb[0].mxu0 %v344
  %v570 = vpop.f32.mrb[0].mxu0
  %v571 = vadd.f32 %v366, %v570
  %v572 = vpop.f32.mrb[0].mxu0
  %v573 = vpop.f32.mrb[0].mxu0
  %v574 = vadd.f32 %v366, %v573
  %v575 = vpop.f32.mrb[0].mxu0
  %576 = vdwg.mxu0
  %v577 = vmax.f32 %v451, 0.0
  %v578 = vmax.f32 %v454, 0.0
  %v579 = vmax.f32 %v459, 0.0
  %v580 = vmax.f32 %v462, 0.0
  %v581 = vmax.f32 %v467, 0.0
  %v582 = vmax.f32 %v470, 0.0
  %v583 = vmax.f32 %v475, 0.0
  %v584 = vmax.f32 %v478, 0.0
  %v585 = vmax.f32 %v483, 0.0
  %v586 = vmax.f32 %v486, 0.0
  %v587 = vmax.f32 %v491, 0.0
  %v588 = vmax.f32 %v494, 0.0
  %v589 = vmax.f32 %v499, 0.0
  %v590 = vmax.f32 %v502, 0.0
  %v591 = vmax.f32 %v507, 0.0
  %v592 = vmax.f32 %v510, 0.0
  %v593 = vmax.f32 %v515, 0.0
  %v594 = vmax.f32 %v518, 0.0
  %v595 = vmax.f32 %v523, 0.0
  %v596 = vmax.f32 %v526, 0.0
  %v597 = vmax.f32 %v531, 0.0
  %v598 = vmax.f32 %v534, 0.0
  %v599 = vmax.f32 %v539, 0.0
  %v600 = vmax.f32 %v542, 0.0
  %v601 = vmax.f32 %v547, 0.0
  %v602 = vmax.f32 %v550, 0.0
  %v603 = vmax.f32 %v555, 0.0
  %v604 = vmax.f32 %v558, 0.0
  %v605 = vmax.f32 %v563, 0.0
  %v606 = vmax.f32 %v566, 0.0
  %v607 = vmax.f32 %v571, 0.0
  %v608 = vmax.f32 %v574, 0.0
  %v609 = vpack.c.bf16 %v578, %v577
  %v610 = vpack.c.bf16 %v580, %v579
  %v611 = vpack.c.bf16 %v582, %v581
  %v612 = vpack.c.bf16 %v584, %v583
  %v613 = vpack.c.bf16 %v586, %v585
  %v614 = vpack.c.bf16 %v588, %v587
  %v615 = vpack.c.bf16 %v590, %v589
  %v616 = vpack.c.bf16 %v592, %v591
  %v617 = vpack.c.bf16 %v594, %v593
  %v618 = vpack.c.bf16 %v596, %v595
  %v619 = vpack.c.bf16 %v598, %v597
  %v620 = vpack.c.bf16 %v600, %v599
  %v621 = vpack.c.bf16 %v602, %v601
  %v622 = vpack.c.bf16 %v604, %v603
  %v623 = vpack.c.bf16 %v606, %v605
  %v624 = vpack.c.bf16 %v608, %v607
  %v625 = vld [vmem:[%s5] sm:$0xf]
  %v626 = vld [vmem:[%s5 + $0x4] sm:$0xf]
  %v627 = vld [vmem:[%s5 + $0x8] sm:$0xf]
  %v628 = vld [vmem:[%s5 + $0xc] sm:$0xf]
  %v629 = vld [vmem:[%s5 + $0x10] sm:$0xf]
  %v630 = vld [vmem:[%s5 + $0x14] sm:$0xf]
  %v631 = vld [vmem:[%s5 + $0x18] sm:$0xf]
  %v632 = vld [vmem:[%s5 + $0x1c] sm:$0xf]
  %v633 = vld [vmem:[%s5 + $0x20] sm:$0xf]
  %v634 = vld [vmem:[%s5 + $0x24] sm:$0xf]
  %v635 = vld [vmem:[%s5 + $0x28] sm:$0xf]
  %v636 = vld [vmem:[%s5 + $0x2c] sm:$0xf]
  %v637 = vld [vmem:[%s5 + $0x30] sm:$0xf]
  %v638 = vld [vmem:[%s5 + $0x34] sm:$0xf]
  %v639 = vld [vmem:[%s5 + $0x38] sm:$0xf]
  %v640 = vld [vmem:[%s5 + $0x3c] sm:$0xf]
  %v641 = vld [vmem:[%s6] sm:$0x1]
  %v643 = vlaneseq
  %v644 = vshrl.u32 %v643, 7
  %v645 = vsub.s32 0, %v644
  %v646 = vrot.slane %v641, %v645
  %v664 = vunpack.c.l.b16 %v625
  %v665 = vunpack.c.l.b16 %v626
  %v666 = vunpack.c.l.b16 %v627
  %v667 = vunpack.c.l.b16 %v628
  %v668 = vunpack.c.l.b16 %v629
  %v669 = vunpack.c.l.b16 %v630
  %v670 = vunpack.c.l.b16 %v631
  %v671 = vunpack.c.l.b16 %v632
  %v672 = vunpack.c.l.b16 %v633
  %v673 = vunpack.c.l.b16 %v634
  %v674 = vunpack.c.l.b16 %v635
  %v675 = vunpack.c.l.b16 %v636
  %v676 = vunpack.c.l.b16 %v637
  %v677 = vunpack.c.l.b16 %v638
  %v678 = vunpack.c.l.b16 %v639
  %v679 = vunpack.c.l.b16 %v640
  %v680 = vpack.c.b16 %v665, %v664
  %v681 = vpack.c.b16 %v667, %v666
  %v682 = vpack.c.b16 %v669, %v668
  %v683 = vpack.c.b16 %v671, %v670
  %v684 = vpack.c.b16 %v673, %v672
  %v685 = vpack.c.b16 %v675, %v674
  %v686 = vpack.c.b16 %v677, %v676
  %v687 = vpack.c.b16 %v679, %v678
  %696 = vmatprep.subr.bf16.mxu0 0
  %697 = vmatpush1.bf16.msra.mxu0 %v680
  %698 = vmatprep.subr.bf16.mxu0 0
  %699 = vmatpush1.bf16.msra.mxu0 %v681
  %700 = vmatprep.subr.bf16.mxu0 0
  %701 = vmatpush1.bf16.msra.mxu0 %v682
  %702 = vmatprep.subr.bf16.mxu0 0
  %703 = vmatpush1.bf16.msra.mxu0 %v683
  %704 = vmatprep.subr.bf16.mxu0 0
  %705 = vmatpush1.bf16.msra.mxu0 %v684
  %706 = vmatprep.subr.bf16.mxu0 0
  %707 = vmatpush1.bf16.msra.mxu0 %v685
  %708 = vmatprep.subr.bf16.mxu0 0
  %709 = vmatpush1.bf16.msra.mxu0 %v686
  %710 = vmatprep.subr.bf16.mxu0 0
  %711 = vmatpush1.bf16.msra.mxu0 %v687
  %712 = vmatprep.subr.bf16.mxu0 0
  %713 = vmatpush1.bf16.msra.mxu0 0
  %714 = vmatprep.subr.bf16.mxu0 0
  %715 = vmatpush1.bf16.msra.mxu0 0
  %716 = vmatprep.subr.bf16.mxu0 0
  %717 = vmatpush1.bf16.msra.mxu0 0
  %718 = vmatprep.subr.bf16.mxu0 0
  %719 = vmatpush1.bf16.msra.mxu0 0
  %720 = vmatprep.subr.bf16.mxu0 0
  %721 = vmatpush1.bf16.msra.mxu0 0
  %722 = vmatprep.subr.bf16.mxu0 0
  %723 = vmatpush1.bf16.msra.mxu0 0
  %724 = vmatprep.subr.bf16.mxu0 0
  %725 = vmatpush1.bf16.msra.mxu0 0
  %726 = vmatprep.subr.bf16.mxu0 0
  %727 = vmatpush1.bf16.msra.mxu0 0
  %728 = vmatprep.mubr.bf16.mxu0 0
  %729 = vmatmul.mubr.bf16.gmra.mrb[0].mxu0 %v609
  %v730 = vpop.f32.mrb[0].mxu0
  %v731 = vadd.f32 %v646, %v730
  %v732 = vpop.f32.mrb[0].mxu0
  %v733 = vpop.f32.mrb[0].mxu0
  %v734 = vadd.f32 %v646, %v733
  %v735 = vpop.f32.mrb[0].mxu0
  %736 = vmatprep.mubr.bf16.mxu0 0
  %737 = vmatmul.mubr.bf16.gmra.mrb[0].mxu0 %v610
  %v738 = vpop.f32.mrb[0].mxu0
  %v739 = vadd.f32 %v646, %v738
  %v740 = vpop.f32.mrb[0].mxu0
  %v741 = vpop.f32.mrb[0].mxu0
  %v742 = vadd.f32 %v646, %v741
  %v743 = vpop.f32.mrb[0].mxu0
  %744 = vmatprep.mubr.bf16.mxu0 0
  %745 = vmatmul.mubr.bf16.gmra.mrb[0].mxu0 %v611
  %v746 = vpop.f32.mrb[0].mxu0
  %v747 = vadd.f32 %v646, %v746
  %v748 = vpop.f32.mrb[0].mxu0
  %v749 = vpop.f32.mrb[0].mxu0
  %v750 = vadd.f32 %v646, %v749
  %v751 = vpop.f32.mrb[0].mxu0
  %752 = vmatprep.mubr.bf16.mxu0 0
  %753 = vmatmul.mubr.bf16.gmra.mrb[0].mxu0 %v612
  %v754 = vpop.f32.mrb[0].mxu0
  %v755 = vadd.f32 %v646, %v754
  %v756 = vpop.f32.mrb[0].mxu0
  %v757 = vpop.f32.mrb[0].mxu0
  %v758 = vadd.f32 %v646, %v757
  %v759 = vpop.f32.mrb[0].mxu0
  %760 = vmatprep.mubr.bf16.mxu0 0
  %761 = vmatmul.mubr.bf16.gmra.mrb[0].mxu0 %v613
  %v762 = vpop.f32.mrb[0].mxu0
  %v763 = vadd.f32 %v646, %v762
  %v764 = vpop.f32.mrb[0].mxu0
  %v765 = vpop.f32.mrb[0].mxu0
  %v766 = vadd.f32 %v646, %v765
  %v767 = vpop.f32.mrb[0].mxu0
  %768 = vmatprep.mubr.bf16.mxu0 0
  %769 = vmatmul.mubr.bf16.gmra.mrb[0].mxu0 %v614
  %v770 = vpop.f32.mrb[0].mxu0
  %v771 = vadd.f32 %v646, %v770
  %v772 = vpop.f32.mrb[0].mxu0
  %v773 = vpop.f32.mrb[0].mxu0
  %v774 = vadd.f32 %v646, %v773
  %v775 = vpop.f32.mrb[0].mxu0
  %776 = vmatprep.mubr.bf16.mxu0 0
  %777 = vmatmul.mubr.bf16.gmra.mrb[0].mxu0 %v615
  %v778 = vpop.f32.mrb[0].mxu0
  %v779 = vadd.f32 %v646, %v778
  %v780 = vpop.f32.mrb[0].mxu0
  %v781 = vpop.f32.mrb[0].mxu0
  %v782 = vadd.f32 %v646, %v781
  %v783 = vpop.f32.mrb[0].mxu0
  %784 = vmatprep.mubr.bf16.mxu0 0
  %785 = vmatmul.mubr.bf16.gmra.mrb[0].mxu0 %v616
  %v786 = vpop.f32.mrb[0].mxu0
  %v787 = vadd.f32 %v646, %v786
  %v788 = vpop.f32.mrb[0].mxu0
  %v789 = vpop.f32.mrb[0].mxu0
  %v790 = vadd.f32 %v646, %v789
  %v791 = vpop.f32.mrb[0].mxu0
  %792 = vmatprep.mubr.bf16.mxu0 0
  %793 = vmatmul.mubr.bf16.gmra.mrb[0].mxu0 %v617
  %v794 = vpop.f32.mrb[0].mxu0
  %v795 = vadd.f32 %v646, %v794
  %v796 = vpop.f32.mrb[0].mxu0
  %v797 = vpop.f32.mrb[0].mxu0
  %v798 = vadd.f32 %v646, %v797
  %v799 = vpop.f32.mrb[0].mxu0
  %800 = vmatprep.mubr.bf16.mxu0 0
  %801 = vmatmul.mubr.bf16.gmra.mrb[0].mxu0 %v618
  %v802 = vpop.f32.mrb[0].mxu0
  %v803 = vadd.f32 %v646, %v802
  %v804 = vpop.f32.mrb[0].mxu0
  %v805 = vpop.f32.mrb[0].mxu0
  %v806 = vadd.f32 %v646, %v805
  %v807 = vpop.f32.mrb[0].mxu0
  %808 = vmatprep.mubr.bf16.mxu0 0
  %809 = vmatmul.mubr.bf16.gmra.mrb[0].mxu0 %v619
  %v810 = vpop.f32.mrb[0].mxu0
  %v811 = vadd.f32 %v646, %v810
  %v812 = vpop.f32.mrb[0].mxu0
  %v813 = vpop.f32.mrb[0].mxu0
  %v814 = vadd.f32 %v646, %v813
  %v815 = vpop.f32.mrb[0].mxu0
  %816 = vmatprep.mubr.bf16.mxu0 0
  %817 = vmatmul.mubr.bf16.gmra.mrb[0].mxu0 %v620
  %v818 = vpop.f32.mrb[0].mxu0
  %v819 = vadd.f32 %v646, %v818
  %v820 = vpop.f32.mrb[0].mxu0
  %v821 = vpop.f32.mrb[0].mxu0
  %v822 = vadd.f32 %v646, %v821
  %v823 = vpop.f32.mrb[0].mxu0
  %824 = vmatprep.mubr.bf16.mxu0 0
  %825 = vmatmul.mubr.bf16.gmra.mrb[0].mxu0 %v621
  %v826 = vpop.f32.mrb[0].mxu0
  %v827 = vadd.f32 %v646, %v826
  %v828 = vpop.f32.mrb[0].mxu0
  %v829 = vpop.f32.mrb[0].mxu0
  %v830 = vadd.f32 %v646, %v829
  %v831 = vpop.f32.mrb[0].mxu0
  %832 = vmatprep.mubr.bf16.mxu0 0
  %833 = vmatmul.mubr.bf16.gmra.mrb[0].mxu0 %v622
  %v834 = vpop.f32.mrb[0].mxu0
  %v835 = vadd.f32 %v646, %v834
  %v836 = vpop.f32.mrb[0].mxu0
  %v837 = vpop.f32.mrb[0].mxu0
  %v838 = vadd.f32 %v646, %v837
  %v839 = vpop.f32.mrb[0].mxu0
  %840 = vmatprep.mubr.bf16.mxu0 0
  %841 = vmatmul.mubr.bf16.gmra.mrb[0].mxu0 %v623
  %v842 = vpop.f32.mrb[0].mxu0
  %v843 = vadd.f32 %v646, %v842
  %v844 = vpop.f32.mrb[0].mxu0
  %v845 = vpop.f32.mrb[0].mxu0
  %v846 = vadd.f32 %v646, %v845
  %v847 = vpop.f32.mrb[0].mxu0
  %848 = vmatprep.mubr.bf16.mxu0 0
  %849 = vmatmul.mubr.bf16.gmra.mrb[0].mxu0 %v624
  %v850 = vpop.f32.mrb[0].mxu0
  %v851 = vadd.f32 %v646, %v850
  %v852 = vpop.f32.mrb[0].mxu0
  %v853 = vpop.f32.mrb[0].mxu0
  %v854 = vadd.f32 %v646, %v853
  %v855 = vpop.f32.mrb[0].mxu0
  %856 = vdwg.mxu0
  %vm857 = vcmask 15360
  %858 = vst.msk [vmem:[%s7] sm:$0xff] %vm857, %v731
  %859 = vst.msk [vmem:[%s7 + $0x8] sm:$0xff] %vm857, %v734
  %860 = vst.msk [vmem:[%s7 + $0x10] sm:$0xff] %vm857, %v739
  %861 = vst.msk [vmem:[%s7 + $0x18] sm:$0xff] %vm857, %v742
  %862 = vst.msk [vmem:[%s7 + $0x20] sm:$0xff] %vm857, %v747
  %863 = vst.msk [vmem:[%s7 + $0x28] sm:$0xff] %vm857, %v750
  %864 = vst.msk [vmem:[%s7 + $0x30] sm:$0xff] %vm857, %v755
  %865 = vst.msk [vmem:[%s7 + $0x38] sm:$0xff] %vm857, %v758
  %866 = vst.msk [vmem:[%s7 + $0x40] sm:$0xff] %vm857, %v763
  %867 = vst.msk [vmem:[%s7 + $0x48] sm:$0xff] %vm857, %v766
  %868 = vst.msk [vmem:[%s7 + $0x50] sm:$0xff] %vm857, %v771
  %869 = vst.msk [vmem:[%s7 + $0x58] sm:$0xff] %vm857, %v774
  %870 = vst.msk [vmem:[%s7 + $0x60] sm:$0xff] %vm857, %v779
  %871 = vst.msk [vmem:[%s7 + $0x68] sm:$0xff] %vm857, %v782
  %872 = vst.msk [vmem:[%s7 + $0x70] sm:$0xff] %vm857, %v787
  %873 = vst.msk [vmem:[%s7 + $0x78] sm:$0xff] %vm857, %v790
  %874 = vst.msk [vmem:[%s7 + $0x80] sm:$0xff] %vm857, %v795
  %875 = vst.msk [vmem:[%s7 + $0x88] sm:$0xff] %vm857, %v798
  %876 = vst.msk [vmem:[%s7 + $0x90] sm:$0xff] %vm857, %v803
  %877 = vst.msk [vmem:[%s7 + $0x98] sm:$0xff] %vm857, %v806
  %878 = vst.msk [vmem:[%s7 + $0xa0] sm:$0xff] %vm857, %v811
  %879 = vst.msk [vmem:[%s7 + $0xa8] sm:$0xff] %vm857, %v814
  %880 = vst.msk [vmem:[%s7 + $0xb0] sm:$0xff] %vm857, %v819
  %881 = vst.msk [vmem:[%s7 + $0xb8] sm:$0xff] %vm857, %v822
  %882 = vst.msk [vmem:[%s7 + $0xc0] sm:$0xff] %vm857, %v827
  %883 = vst.msk [vmem:[%s7 + $0xc8] sm:$0xff] %vm857, %v830
  %884 = vst.msk [vmem:[%s7 + $0xd0] sm:$0xff] %vm857, %v835
  %885 = vst.msk [vmem:[%s7 + $0xd8] sm:$0xff] %vm857, %v838
  %886 = vst.msk [vmem:[%s7 + $0xe0] sm:$0xff] %vm857, %v843
  %887 = vst.msk [vmem:[%s7 + $0xe8] sm:$0xff] %vm857, %v846
  %888 = vst.msk [vmem:[%s7 + $0xf0] sm:$0xff] %vm857, %v851
  %889 = vst.msk [vmem:[%s7 + $0xf8] sm:$0xff] %vm857, %v854
  // Predicated region
  $region30: #{dqn_forward.1} parent=0 // pred_check
    _
  $region31: #{dqn_forward.1} parent=0 // pred_check_branch
    %891 = sbr.rel (0) target = $region33
  $region32: #{dqn_forward.1} parent=0 // pred_region
    _
  $region33: #{dqn_forward.1} parent=0 // pred_fallthru
    _
  // Predicated region
  $region34: #{dqn_forward.1} parent=0 // pred_check
    _
  $region35: #{dqn_forward.1} parent=0 // pred_check_branch
    %893 = sbr.rel (0) target = $region37
  $region36: #{dqn_forward.1} parent=0 // pred_region
    _
  $region37: #{dqn_forward.1} parent=0 // pred_fallthru
    _

</llo_original>
